<compile_context>
chip_gen: v6e
topology: v6e:2x2x1
jax: 0.10.0
libtpu: 0.0.40
codegen_flags: <defaults>
</compile_context>

<pallas_src>
import functools

import jax
import jax.numpy as jnp
from jax import lax
from jax.experimental import pallas as pl
from jax.experimental.pallas import tpu as pltpu


_NEG_BIG = -1e30  # finite "minus infinity": exp(_NEG_BIG - max) underflows to 0


def _round_up(x, m):
    return ((x + m - 1) // m) * m


def _ce_kernel(logits_ref, labels_ref, nll_ref, m_sc, l_sc, t_sc, *, num_classes):
    """One (TILE_N, TILE_C) tile of the stabilized cross-entropy.

    Scratch (persistent across the C grid axis, reset at c_idx == 0), all
    per-lane accumulators of width W = min(128, TILE_C):
      m_sc: running per-lane max                     (TILE_N, W) f32
      l_sc: running per-lane sum of exp(x - m)       (TILE_N, W) f32
      t_sc: per-lane true-class logit contributions  (TILE_N, W) f32
    """
    c_idx = pl.program_id(1)
    n_c_tiles = pl.num_programs(1)

    @pl.when(c_idx == 0)
    def _():
        m_sc[...] = jnp.full(m_sc.shape, _NEG_BIG, dtype=jnp.float32)
        l_sc[...] = jnp.zeros(l_sc.shape, dtype=jnp.float32)
        t_sc[...] = jnp.zeros(t_sc.shape, dtype=jnp.float32)

    x = logits_ref[...].astype(jnp.float32)          # (TN, TC)
    tn, tc = x.shape
    w = m_sc.shape[1]                                # lane-group width
    n_groups = tc // w

    # Label offset moved to the (TN, 1) side; the iota is loop-invariant.
    labels_local = labels_ref[...] - c_idx * tc      # (TN, 1) int32
    lane_iota = lax.broadcasted_iota(jnp.int32, (tn, w), 1)

    # Only the last C tile can contain out-of-range columns; if C divides the
    # tile width this masking is compiled out entirely (static Python check).
    need_col_mask = (num_classes % tc) != 0

    # ---- per-lane fold of this tile (pure VPU, unrolled static loop) ----
    groups = []
    for g in range(n_groups):
        xg = x[:, g * w:(g + 1) * w]                 # (TN, W)
        if need_col_mask:
            col_ok = (c_idx * tc + g * w + lane_iota) < num_classes
            xg = jnp.where(col_ok, xg, _NEG_BIG)
        groups.append(xg)

    m_prev = m_sc[...]
    m_tile = groups[0]
    for xg in groups[1:]:
        m_tile = jnp.maximum(m_tile, xg)
    m_new = jnp.maximum(m_prev, m_tile)              # (TN, W)

    # m_prev <= m_new always and m_prev is finite -> alpha in [0, 1], no NaN.
    alpha = jnp.exp(m_prev - m_new)
    l_new = alpha * l_sc[...]
    t_new = t_sc[...]
    for g, xg in enumerate(groups):
        l_new = l_new + jnp.exp(xg - m_new)          # EUP exp, VPU add
        onehot = lane_iota == (labels_local - g * w)  # (TN, W)
        t_new = t_new + jnp.where(onehot, xg, 0.0)

    m_sc[...] = m_new
    l_sc[...] = l_new
    t_sc[...] = t_new

    # ---- final cross-lane combine (only once per row tile) ----
    @pl.when(c_idx == n_c_tiles - 1)
    def _():
        m_lane = m_sc[...]                                   # (TN, W)
        m_row = jnp.max(m_lane, axis=1, keepdims=True)       # (TN, 1)
        l_row = jnp.sum(l_sc[...] * jnp.exp(m_lane - m_row),
                        axis=1, keepdims=True)
        t_row = jnp.sum(t_sc[...], axis=1, keepdims=True)
        # -log softmax[label] = logsumexp(x) - x[label]
        nll_ref[...] = m_row + jnp.log(l_row) - t_row


@functools.partial(jax.jit, static_argnames=("tile_n", "tile_c"))
def cross_entropy_loss(logits, labels, *, tile_n=256, tile_c=2048):
    """Pallas-backed CrossEntropyLoss: mean over rows of -log softmax[label]."""
    n, c = logits.shape

    # ---- static tile selection (lane/sublane aligned or full-dim) ----
    if c <= 128:
        tc = c                                    # full class dim, no masking
    else:
        tc = min(tile_c, _round_up(c, 128))       # multiple of 128
    if n <= 8:
        tn = n                                    # full batch dim
    else:
        tn = min(tile_n, _round_up(n, 8))
        # v7x has 2 TensorCores: give the parallel N axis >= 2 tiles.
        if tn >= n:
            tn = max(8, _round_up((n + 1) // 2, 8))

    w = min(128, tc)                              # per-lane accumulator width
    grid = (pl.cdiv(n, tn), pl.cdiv(c, tc))

    labels_2d = labels.astype(jnp.int32).reshape(n, 1)

    cost = pl.CostEstimate(
        flops=5 * n * c,
        transcendentals=n * c,
        bytes_accessed=n * c * logits.dtype.itemsize + 8 * n,
    )

    nll = pl.pallas_call(
        functools.partial(_ce_kernel, num_classes=c),
        out_shape=jax.ShapeDtypeStruct((n, 1), jnp.float32),
        grid_spec=pltpu.PrefetchScalarGridSpec(
            num_scalar_prefetch=0,
            grid=grid,
            in_specs=[
                pl.BlockSpec((tn, tc), lambda i, j: (i, j)),   # logits (streamed)
                pl.BlockSpec((tn, 1), lambda i, j: (i, 0)),    # labels (resident)
            ],
            out_specs=pl.BlockSpec((tn, 1), lambda i, j: (i, 0)),
            scratch_shapes=[
                pltpu.VMEM((tn, w), jnp.float32),  # running per-lane max
                pltpu.VMEM((tn, w), jnp.float32),  # running per-lane sum(exp)
                pltpu.VMEM((tn, w), jnp.float32),  # per-lane true-class logit
            ],
        ),
        compiler_params=pltpu.CompilerParams(
            dimension_semantics=("parallel", "arbitrary"),
            vmem_limit_bytes=32 * 1024 * 1024,
        ),
        cost_estimate=cost,
    )(logits, labels_2d)

    # Tiny final mean stays in the wrapper so the N grid axis stays parallel.
    return jnp.mean(nll)


def _reference_loss(logits, labels):
    # Same math as the PyTorch module, written in a numerically stable form.
    logits = logits.astype(jnp.float32)
    lse = jax.scipy.special.logsumexp(logits, axis=1)
    true_logit = jnp.take_along_axis(
        logits, labels.astype(jnp.int32)[:, None], axis=1)[:, 0]
    return jnp.mean(lse - true_logit)


if __name__ == "__main__":
    key = jax.random.PRNGKey(0)
    k1, k2 = jax.random.split(key)

    # Small shapes consistent with the module: batch=8, classes=32.
    N, C = 8, 32
    logits = jax.random.normal(k1, (N, C), dtype=jnp.float32)
    labels = jax.random.randint(k2, (N,), 0, C, dtype=jnp.int32)

    loss = cross_entropy_loss(logits, labels)
    jax.block_until_ready(loss)
    ref = _reference_loss(logits, labels)
    assert jnp.allclose(loss, ref, rtol=1e-5, atol=1e-5), (loss, ref)

    # Non-aligned, multi-tile shape: exercises ragged row/column tiles,
    # in-kernel column masking, and the streamed online logsumexp.
    k3, k4 = jax.random.split(k2)
    N2, C2 = 37, 300
    logits2 = jax.random.normal(k3, (N2, C2), dtype=jnp.float32) * 10.0
    labels2 = jax.random.randint(k4, (N2,), 0, C2, dtype=jnp.int32)
    loss2 = cross_entropy_loss(logits2, labels2, tile_c=128)
    jax.block_until_ready(loss2)
    ref2 = _reference_loss(logits2, labels2)
    assert jnp.allclose(loss2, ref2, rtol=1e-4, atol=1e-4), (loss2, ref2)

    # bf16 logits stay bf16 in HBM; upcast to f32 happens inside the kernel.
    logits3 = logits2.astype(jnp.bfloat16)
    loss3 = cross_entropy_loss(logits3, labels2, tile_c=128)
    jax.block_until_ready(loss3)
    ref3 = _reference_loss(logits3.astype(jnp.float32), labels2)
    assert jnp.allclose(loss3, ref3, rtol=1e-3, atol=1e-3), (loss3, ref3)

    print("KERNEL_OK")
</pallas_src>

<mosaic_0001>
module attributes {stable_mosaic.version = 11 : i64} {
  func.func @_ce_kernel(%arg0: i32, %arg1: i32, %arg2: memref<8x32xf32, #tpu.memory_space<vmem>>, %arg3: memref<8x1xi32, #tpu.memory_space<vmem>>, %arg4: memref<8x1xf32, #tpu.memory_space<vmem>>, %arg5: memref<8x32xf32, #tpu.memory_space<vmem>>, %arg6: memref<8x32xf32, #tpu.memory_space<vmem>>, %arg7: memref<8x32xf32, #tpu.memory_space<vmem>>) attributes {dimension_semantics = [#tpu.dimension_semantics<parallel>, #tpu.dimension_semantics<arbitrary>], iteration_bounds = array<i64: 1, 1>, scalar_prefetch = 0 : i64, scratch_operands = 3 : i64, tpu.core_type = #tpu.core_type<tc>, window_params = [{transform_indices = @transform_0, window_bounds = array<i64: 8, 32>}, {transform_indices = @transform_1, window_bounds = array<i64: 8, 1>}, {transform_indices = @transform_2, window_bounds = array<i64: 8, 1>}]} {
    %c0_i32 = arith.constant 0 : i32
    %0 = arith.cmpi eq, %arg1, %c0_i32 : i32
    %1 = arith.extui %0 : i1 to i32
    %c0_i32_0 = arith.constant 0 : i32
    %2 = arith.cmpi ne, %1, %c0_i32_0 : i32
    scf.if %2 {
      %cst_19 = arith.constant -1.000000e+30 : f32
      %32 = vector.broadcast %cst_19 : f32 to vector<8x32xf32>
      %c0_20 = arith.constant 0 : index
      %c0_21 = arith.constant 0 : index
      %33 = vector.load %arg5[%c0_20, %c0_21] : memref<8x32xf32, #tpu.memory_space<vmem>>, vector<8x32xf32>
      tpu.vector_store %arg5[%c0_20, %c0_21], %32 {strides = array<i32>} : memref<8x32xf32, #tpu.memory_space<vmem>>, vector<8x32xf32>,
      %cst_22 = arith.constant 0.000000e+00 : f32
      %34 = vector.broadcast %cst_22 : f32 to vector<8x32xf32>
      %c0_23 = arith.constant 0 : index
      %c0_24 = arith.constant 0 : index
      %35 = vector.load %arg6[%c0_23, %c0_24] : memref<8x32xf32, #tpu.memory_space<vmem>>, vector<8x32xf32>
      tpu.vector_store %arg6[%c0_23, %c0_24], %34 {strides = array<i32>} : memref<8x32xf32, #tpu.memory_space<vmem>>, vector<8x32xf32>,
      %cst_25 = arith.constant 0.000000e+00 : f32
      %36 = vector.broadcast %cst_25 : f32 to vector<8x32xf32>
      %c0_26 = arith.constant 0 : index
      %c0_27 = arith.constant 0 : index
      %37 = vector.load %arg7[%c0_26, %c0_27] : memref<8x32xf32, #tpu.memory_space<vmem>>, vector<8x32xf32>
      tpu.vector_store %arg7[%c0_26, %c0_27], %36 {strides = array<i32>} : memref<8x32xf32, #tpu.memory_space<vmem>>, vector<8x32xf32>,
    } else {
    }
    %c0 = arith.constant 0 : index
    %c0_1 = arith.constant 0 : index
    %3 = vector.load %arg2[%c0, %c0_1] : memref<8x32xf32, #tpu.memory_space<vmem>>, vector<8x32xf32>
    %c0_2 = arith.constant 0 : index
    %c0_3 = arith.constant 0 : index
    %4 = vector.load %arg3[%c0_2, %c0_3] : memref<8x1xi32, #tpu.memory_space<vmem>>, vector<8x1xi32>
    %c32_i32 = arith.constant 32 : i32
    %5 = arith.muli %arg1, %c32_i32 : i32
    %6 = vector.broadcast %5 : i32 to vector<8x1xi32>
    %7 = arith.subi %4, %6 : vector<8x1xi32>
    %8 = tpu.iota {dimensions = array<i32: 1>} : vector<8x32xi32>
    %c0_4 = arith.constant 0 : index
    %c0_5 = arith.constant 0 : index
    %9 = vector.load %arg5[%c0_4, %c0_5] : memref<8x32xf32, #tpu.memory_space<vmem>>, vector<8x32xf32>
    %10 = arith.maximumf %9, %3 : vector<8x32xf32>
    %11 = arith.subf %9, %10 : vector<8x32xf32>
    %12 = math.exp %11 : vector<8x32xf32>
    %c0_6 = arith.constant 0 : index
    %c0_7 = arith.constant 0 : index
    %13 = vector.load %arg6[%c0_6, %c0_7] : memref<8x32xf32, #tpu.memory_space<vmem>>, vector<8x32xf32>
    %14 = arith.mulf %12, %13 : vector<8x32xf32>
    %c0_8 = arith.constant 0 : index
    %c0_9 = arith.constant 0 : index
    %15 = vector.load %arg7[%c0_8, %c0_9] : memref<8x32xf32, #tpu.memory_space<vmem>>, vector<8x32xf32>
    %16 = arith.subf %3, %10 : vector<8x32xf32>
    %17 = math.exp %16 : vector<8x32xf32>
    %18 = arith.addf %14, %17 : vector<8x32xf32>
    %c0_i32_10 = arith.constant 0 : i32
    %19 = vector.broadcast %c0_i32_10 : i32 to vector<8x1xi32>
    %20 = arith.subi %7, %19 : vector<8x1xi32>
    %21 = vector.broadcast %20 : vector<8x1xi32> to vector<8x32xi32>
    %22 = arith.cmpi eq, %8, %21 : vector<8x32xi32>
    %cst = arith.constant 0.000000e+00 : f32
    %23 = vector.broadcast %cst : f32 to vector<8x32xf32>
    %24 = arith.select %22, %3, %23 : vector<8x32xi1>, vector<8x32xf32>
    %25 = arith.addf %15, %24 : vector<8x32xf32>
    %c0_11 = arith.constant 0 : index
    %c0_12 = arith.constant 0 : index
    %26 = vector.load %arg5[%c0_11, %c0_12] : memref<8x32xf32, #tpu.memory_space<vmem>>, vector<8x32xf32>
    tpu.vector_store %arg5[%c0_11, %c0_12], %10 {strides = array<i32>} : memref<8x32xf32, #tpu.memory_space<vmem>>, vector<8x32xf32>,
    %c0_13 = arith.constant 0 : index
    %c0_14 = arith.constant 0 : index
    %27 = vector.load %arg6[%c0_13, %c0_14] : memref<8x32xf32, #tpu.memory_space<vmem>>, vector<8x32xf32>
    tpu.vector_store %arg6[%c0_13, %c0_14], %18 {strides = array<i32>} : memref<8x32xf32, #tpu.memory_space<vmem>>, vector<8x32xf32>,
    %c0_15 = arith.constant 0 : index
    %c0_16 = arith.constant 0 : index
    %28 = vector.load %arg7[%c0_15, %c0_16] : memref<8x32xf32, #tpu.memory_space<vmem>>, vector<8x32xf32>
    tpu.vector_store %arg7[%c0_15, %c0_16], %25 {strides = array<i32>} : memref<8x32xf32, #tpu.memory_space<vmem>>, vector<8x32xf32>,
    %c0_i32_17 = arith.constant 0 : i32
    %29 = arith.cmpi eq, %arg1, %c0_i32_17 : i32
    %30 = arith.extui %29 : i1 to i32
    %c0_i32_18 = arith.constant 0 : i32
    %31 = arith.cmpi ne, %30, %c0_i32_18 : i32
    scf.if %31 {
      %c0_19 = arith.constant 0 : index
      %c0_20 = arith.constant 0 : index
      %32 = vector.load %arg5[%c0_19, %c0_20] : memref<8x32xf32, #tpu.memory_space<vmem>>, vector<8x32xf32>
      %cst_21 = arith.constant dense<0xFF800000> : vector<8xf32>
      %33 = vector.multi_reduction <maximumf>, %32, %cst_21 [1] : vector<8x32xf32> to vector<8xf32>
      %34 = vector.shape_cast %33 : vector<8xf32> to vector<8x1xf32>
      %c0_22 = arith.constant 0 : index
      %c0_23 = arith.constant 0 : index
      %35 = vector.load %arg6[%c0_22, %c0_23] : memref<8x32xf32, #tpu.memory_space<vmem>>, vector<8x32xf32>
      %36 = vector.broadcast %34 : vector<8x1xf32> to vector<8x32xf32>
      %37 = arith.subf %32, %36 : vector<8x32xf32>
      %38 = math.exp %37 : vector<8x32xf32>
      %39 = arith.mulf %35, %38 : vector<8x32xf32>
      %cst_24 = arith.constant dense<0.000000e+00> : vector<8xf32>
      %40 = vector.multi_reduction <add>, %39, %cst_24 [1] : vector<8x32xf32> to vector<8xf32>
      %41 = vector.shape_cast %40 : vector<8xf32> to vector<8x1xf32>
      %c0_25 = arith.constant 0 : index
      %c0_26 = arith.constant 0 : index
      %42 = vector.load %arg7[%c0_25, %c0_26] : memref<8x32xf32, #tpu.memory_space<vmem>>, vector<8x32xf32>
      %cst_27 = arith.constant dense<0.000000e+00> : vector<8xf32>
      %43 = vector.multi_reduction <add>, %42, %cst_27 [1] : vector<8x32xf32> to vector<8xf32>
      %44 = vector.shape_cast %43 : vector<8xf32> to vector<8x1xf32>
      %45 = math.log %41 : vector<8x1xf32>
      %46 = arith.addf %34, %45 : vector<8x1xf32>
      %47 = arith.subf %46, %44 : vector<8x1xf32>
      %c0_28 = arith.constant 0 : index
      %c0_29 = arith.constant 0 : index
      %48 = vector.load %arg4[%c0_28, %c0_29] : memref<8x1xf32, #tpu.memory_space<vmem>>, vector<8x1xf32>
      tpu.vector_store %arg4[%c0_28, %c0_29], %47 {strides = array<i32>} : memref<8x1xf32, #tpu.memory_space<vmem>>, vector<8x1xf32>,
    } else {
    }
    return
  }
  func.func @transform_0(%arg0: i32, %arg1: i32) -> (i32, i32) {
    %c0_i32 = arith.constant 0 : i32
    return %arg0, %arg1 : i32, i32
  }
  func.func @transform_1(%arg0: i32, %arg1: i32) -> (i32, i32) {
    %c0_i32 = arith.constant 0 : i32
    %c0_i32_0 = arith.constant 0 : i32
    return %arg0, %c0_i32 : i32, i32
  }
  func.func @transform_2(%arg0: i32, %arg1: i32) -> (i32, i32) {
    %c0_i32 = arith.constant 0 : i32
    %c0_i32_0 = arith.constant 0 : i32
    return %arg0, %c0_i32 : i32, i32
  }
}

</mosaic_0001>

<llo_original>
// kernel: cross_entropy_loss.1
$region0: #{cross_entropy_loss.1}
  #allocation0 [shape = 'u32[]', space=smem, size = 0x4, offset = 0x4, fixed_abs, tag = 'smem constant byte address 0x4 - core index']
  #allocation1 [shape = 'u32[144,128]{1,0:T(1,128)}', space=vmem, size = 0x12000, scoped, tag = 'internal scratch']
  #allocation2 [shape = 'f32[8,32]{1,0:T(8,128)}', space=vmem, size = 0x1000, scoped, tag = 'scratch operand']
  #allocation3 [shape = 'f32[8,32]{1,0:T(8,128)}', space=vmem, size = 0x1000, scoped, tag = 'scratch operand']
  #allocation4 [shape = 'f32[8,32]{1,0:T(8,128)}', space=vmem, size = 0x1000, scoped, tag = 'scratch operand']
  %s0 = inlined_call_operand.vmem [shape: f32[8,32], index: 0, kind: input, shape index: {}]
  %s1 = inlined_call_operand.vmem [shape: s32[8,1], index: 1, kind: input, shape index: {}]
  %s2 = inlined_call_operand.vmem [shape: f32[8,1], index: 2, kind: output, shape index: {}]
  %s3 = sld [smem:[#allocation0]]
  $region26: #{cross_entropy_loss.1} parent=0
    _
  %s5 = ssub.s32 1, %s3
  %s6 = scalar_select 0, %s5, %s3
  // Predicated region
  $region2: #{cross_entropy_loss.1} parent=0 // pred_check
    _
  $region3: #{cross_entropy_loss.1} parent=0 // pred_check_branch
    %8 = sbr.rel (0) target = $region5
  $region4: #{cross_entropy_loss.1} parent=0 // pred_region
    _
  $region5: #{cross_entropy_loss.1} parent=0 // pred_fallthru
    _
  // Predicated region
  $region6: #{cross_entropy_loss.1} parent=0 // pred_check
    _
  $region7: #{cross_entropy_loss.1} parent=0 // pred_check_branch
    %10 = sbr.rel (0) target = $region9
  $region8: #{cross_entropy_loss.1} parent=0 // pred_region
    _
  $region9: #{cross_entropy_loss.1} parent=0 // pred_fallthru
    _
  %p11 = scmp.eq.s32.totalorder 0, 0
  // Predicated region
  $region10: #{cross_entropy_loss.1} parent=0 // pred_check
    %p12 = pneg %p11
  $region11: #{cross_entropy_loss.1} parent=0 // pred_check_branch
    %14 = sbr.rel (%p12) target = $region13
  $region12: #{cross_entropy_loss.1} parent=0 // pred_region
    %vm15 = vcmask 261120
    %16 = vst.msk [vmem:[#allocation2] sm:$0xff] %vm15, -1e+30
    %17 = vst.msk [vmem:[#allocation3] sm:$0xff] %vm15, 0.0
    %18 = vst.msk [vmem:[#allocation4] sm:$0xff] %vm15, 0.0
  $region13: #{cross_entropy_loss.1} parent=0 // pred_fallthru
    _
  %v19 = vld [vmem:[%s0] sm:$0xff]
  %v20 = vld [vmem:[%s1] sm:$0xff]
  %s21 = smul.u32 0, 32
  %v22 = vstv %s21
  %v23 = vsub.s32 %v20, %v22
  %v24 = vlaneseq
  %v25 = vand.u32 %v24, 127
  %v26 = vld [vmem:[#allocation2] sm:$0xff]
  %v27 = vmax.f32 %v26, %v19
  %v28 = vsub.f32 %v26, %v27
  %v29 = vmul.f32 %v28, 1.442695
  %v30 = vpow.pop %v29
  %v31 = vld [vmem:[#allocation3] sm:$0xff]
  %v32 = vmul.f32 %v30, %v31
  %v33 = vld [vmem:[#allocation4] sm:$0xff]
  %v34 = vsub.f32 %v19, %v27
  %v35 = vmul.f32 %v34, 1.442695
  %v36 = vpow.pop %v35
  %v37 = vadd.f32 %v32, %v36
  %38 = vset.pattern.permute.xlu0 0
  %39 = vperm.xlu0 %38, %v23
  %v40 = vpop.permute.xlu0 %39
  %vm41 = vcmp.eq.s32.totalorder %v25, %v40
  %v42 = vsel %vm41, %v19, 0.0
  %v43 = vadd.f32 %v33, %v42
  %vm44 = vcmask 261120
  %45 = vst.msk [vmem:[#allocation2] sm:$0xff] %vm44, %v27
  %46 = vst.msk [vmem:[#allocation3] sm:$0xff] %vm44, %v37
  %47 = vst.msk [vmem:[#allocation4] sm:$0xff] %vm44, %v43
  // Predicated region
  $region14: #{cross_entropy_loss.1} parent=0 // pred_check
    %p48 = pneg %p11
  $region15: #{cross_entropy_loss.1} parent=0 // pred_check_branch
    %50 = sbr.rel (%p48) target = $region17
  $region16: #{cross_entropy_loss.1} parent=0 // pred_region
    %v51 = vld [vmem:[#allocation2] sm:$0xff]
    %v52 = vsel %vm44, %v51, -inf
    %53 = vmax.xlane.f32.xlu0 %v52
    %v54 = vpop.xlane.xlu0 %53
    %v55 = vld [vmem:[#allocation3] sm:$0xff]
    %v56 = vsub.f32 %v51, %v54
    %v57 = vmul.f32 %v56, 1.442695
    %v58 = vpow.pop %v57
    %v59 = vmul.f32 %v55, %v58
    %v60 = vsel %vm44, %v59, 0.0
    %61 = vadd.xlane.f32.xlu0 %v60
    %v62 = vpop.xlane.xlu0 %61
    %v63 = vld [vmem:[#allocation4] sm:$0xff]
    %v64 = vsel %vm44, %v63, 0.0
    %65 = vadd.xlane.f32.xlu0 %v64
    %v66 = vpop.xlane.xlu0 %65
    %v67 = vlog2.pop %v62
    %v68 = vmul.f32 %v67, 0.6931472
    %v69 = vadd.f32 %v54, %v68
    %v70 = vsub.f32 %v69, %v66
    %vm71 = vcmask 7168
    %72 = vst.msk [vmem:[%s2] sm:$0xff] %vm71, %v70
  $region17: #{cross_entropy_loss.1} parent=0 // pred_fallthru
    _
  // Predicated region
  $region18: #{cross_entropy_loss.1} parent=0 // pred_check
    _
  $region19: #{cross_entropy_loss.1} parent=0 // pred_check_branch
    %74 = sbr.rel (0) target = $region21
  $region20: #{cross_entropy_loss.1} parent=0 // pred_region
    _
  $region21: #{cross_entropy_loss.1} parent=0 // pred_fallthru
    _
  // Predicated region
  $region22: #{cross_entropy_loss.1} parent=0 // pred_check
    _
  $region23: #{cross_entropy_loss.1} parent=0 // pred_check_branch
    %76 = sbr.rel (0) target = $region25
  $region24: #{cross_entropy_loss.1} parent=0 // pred_region
    _
  $region25: #{cross_entropy_loss.1} parent=0 // pred_fallthru
    _

</llo_original>
